<compile_context>
chip_gen: v7x
topology: tpu7x:2x2x1
jax: 0.10.0
libtpu: 0.0.40
codegen_flags: <defaults>
</compile_context>

<pallas_src>
import functools

import jax
import jax.numpy as jnp
from jax.experimental import pallas as pl
from jax.experimental.pallas import tpu as pltpu


def cbam_kernel(x_ref, w1_ref, w2_ref, bpack_ref, m_ref, scal_ref, o_ref):
    f32 = jnp.float32

    x = x_ref[0]                                   # (C, HW), input dtype
    C, HW = x.shape
    Ch = w1_ref.shape[0]

    # ---------------- channel attention ----------------
    # Lane-axis reductions over the flattened spatial dim (f32 accumulation).
    avg = jnp.sum(x.astype(f32), axis=1, keepdims=True) * (1.0 / HW)   # (C, 1)
    mxp = jnp.max(x, axis=1, keepdims=True).astype(f32)                # (C, 1)

    w1 = w1_ref[...]                               # (Ch, C)  = Linear1.weight
    w2 = w2_ref[...]                               # (C, Ch)  = Linear2.weight
    b2 = bpack_ref[:, 0:1]                         # (C, 1)
    b1 = bpack_ref[0:Ch, 1:2]                      # (Ch, 1)

    def mlp(p):                                    # p: (C, 1), column form (no transposes)
        h = jnp.dot(w1, p, preferred_element_type=f32) + b1            # (Ch, 1)
        h = jnp.maximum(h, 0.0)
        return jnp.dot(w2, h, preferred_element_type=f32) + b2         # (C, 1)

    ca = jax.nn.sigmoid(mlp(avg) + mlp(mxp))                           # (C, 1)
    y = x * ca.astype(x.dtype)                                         # (C, HW), lane-broadcast

    # ---------------- spatial attention ----------------
    # Sublane reductions over channels (f32 accumulation).
    cmean = jnp.sum(y.astype(f32), axis=0, keepdims=True) * (1.0 / C)  # (1, HW)
    cmax = jnp.max(y, axis=0, keepdims=True).astype(f32)               # (1, HW)

    # 7x7 conv + BN folded into two (HW, HW) matrices (built in the wrapper) plus
    # a scalar constant (conv bias + BN shift) held in SMEM.
    conv = (jnp.dot(cmean, m_ref[0], preferred_element_type=f32)
            + jnp.dot(cmax, m_ref[1], preferred_element_type=f32)
            + scal_ref[0])                                             # (1, HW)
    sa = jax.nn.sigmoid(conv)                                          # (1, HW)

    o_ref[0] = (y * sa.astype(y.dtype)).astype(o_ref.dtype)            # sublane-broadcast


def _conv7_bn_as_matmul(wconv, H, W, bn_scale):
    """Build M[c] (HW_in, HW_out) s.t. (feat_c_flat @ M[c]) == BN_scale * conv7x7_same(feat_c).

    wconv: (2, 7, 7) conv weights; zero padding is baked into the matrix.
    """
    oh = jnp.arange(H)
    ow = jnp.arange(W)
    di = oh[:, None] - oh[None, :] + 3                  # (H_in, H_out): kernel row index
    dj = ow[:, None] - ow[None, :] + 3                  # (W_in, W_out): kernel col index
    valid = ((di >= 0) & (di <= 6))[:, None, :, None] & \
            ((dj >= 0) & (dj <= 6))[None, :, None, :]   # (H, W, H, W)
    dic = jnp.clip(di, 0, 6)
    djc = jnp.clip(dj, 0, 6)
    m = wconv[:, dic[:, None, :, None], djc[None, :, None, :]]         # (2, H, W, H, W)
    m = jnp.where(valid[None, ...], m, 0.0)
    return (m * bn_scale).reshape(2, H * W, H * W).astype(jnp.float32)


@functools.partial(jax.jit, static_argnames=())
def cbam_forward(x, w1, b1, w2, b2, wconv, bconv, bn_gamma, bn_beta, bn_mean, bn_var):
    eps = 1e-5
    N, C, H, W = x.shape
    HW = H * W
    Ch = w1.shape[0]

    # Lane-dense layout: flatten spatial dims (free reshape at the XLA level).
    x2 = x.reshape(N, C, HW)

    # Fold conv bias + eval-mode BatchNorm into the conv matrices and one scalar.
    bn_scale = bn_gamma[0] / jnp.sqrt(bn_var[0] + eps)
    m = _conv7_bn_as_matmul(wconv.astype(jnp.float32), H, W, bn_scale)          # (2, HW, HW)
    conv_const = jnp.reshape((bconv[0] - bn_mean[0]) * bn_scale + bn_beta[0],
                             (1,)).astype(jnp.float32)

    # Pack the two tiny MLP biases into one small VMEM block: col0 = b2, col1 = b1 (padded).
    b_pack = jnp.zeros((C, 2), jnp.float32)
    b_pack = b_pack.at[:, 0].set(b2.astype(jnp.float32))
    b_pack = b_pack.at[:Ch, 1].set(b1.astype(jnp.float32))

    grid_spec = pltpu.PrefetchScalarGridSpec(
        num_scalar_prefetch=0,
        grid=(N,),
        in_specs=[
            pl.BlockSpec((1, C, HW), lambda n: (n, 0, 0)),              # x (lane-dense)
            pl.BlockSpec((Ch, C), lambda n: (0, 0)),                    # Linear1.weight
            pl.BlockSpec((C, Ch), lambda n: (0, 0)),                    # Linear2.weight
            pl.BlockSpec((C, 2), lambda n: (0, 0)),                     # packed biases
            pl.BlockSpec((2, HW, HW), lambda n: (0, 0, 0)),             # folded conv+BN matrices
            pl.BlockSpec(memory_space=pltpu.MemorySpace.SMEM),          # conv/BN scalar const
        ],
        out_specs=pl.BlockSpec((1, C, HW), lambda n: (n, 0, 0)),
    )

    out2 = pl.pallas_call(
        cbam_kernel,
        out_shape=jax.ShapeDtypeStruct((N, C, HW), x.dtype),
        grid_spec=grid_spec,
        compiler_params=pltpu.CompilerParams(
            dimension_semantics=("parallel",),        # N=2 keeps both v7x TensorCores busy
            vmem_limit_bytes=48 * 1024 * 1024,        # explicit budget (safe on v5e/v6e/v7x)
        ),
    )(x2, w1, w2, b_pack, m, conv_const)

    return out2.reshape(N, C, H, W)


def cbam_reference(x, w1, b1, w2, b2, wconv, bconv, bn_gamma, bn_beta, bn_mean, bn_var):
    """Pure-JAX reference of the same forward pass (NCHW)."""
    eps = 1e-5
    avg = x.mean(axis=(2, 3))                                          # (N, C)
    mx = x.max(axis=(2, 3))                                            # (N, C)

    def mlp(p):
        h = jax.nn.relu(p @ w1.T + b1)
        return h @ w2.T + b2

    ca = jax.nn.sigmoid(mlp(avg) + mlp(mx))[:, :, None, None]          # (N, C, 1, 1)
    y = x * ca

    feat = jnp.concatenate([y.mean(axis=1, keepdims=True),
                            y.max(axis=1, keepdims=True)], axis=1)     # (N, 2, H, W)
    conv = jax.lax.conv_general_dilated(
        feat, wconv.reshape(1, 2, 7, 7), window_strides=(1, 1), padding="SAME",
        dimension_numbers=("NCHW", "OIHW", "NCHW")) + bconv[0]
    conv = (conv - bn_mean[0]) / jnp.sqrt(bn_var[0] + eps) * bn_gamma[0] + bn_beta[0]
    sa = jax.nn.sigmoid(conv)                                          # (N, 1, H, W)
    return y * sa


if __name__ == "__main__":
    # Small shapes consistent with the module: C divisible by `ratio`.
    N, C, H, W = 2, 16, 16, 16
    ratio = 4
    Ch = C // ratio

    key = jax.random.PRNGKey(0)
    k1, k2, k3, k4, k5, k6, kx = jax.random.split(key, 7)

    # Synthetic parameters (same shapes the PyTorch module would create).
    w1 = jax.random.normal(k1, (Ch, C), jnp.float32) * 0.3      # Linear(C -> Ch).weight
    b1 = jax.random.normal(k2, (Ch,), jnp.float32) * 0.1        # Linear(C -> Ch).bias
    w2 = jax.random.normal(k3, (C, Ch), jnp.float32) * 0.3      # Linear(Ch -> C).weight
    b2 = jax.random.normal(k4, (C,), jnp.float32) * 0.1         # Linear(Ch -> C).bias
    wconv = jax.random.normal(k5, (2, 7, 7), jnp.float32) * 0.1 # Conv2d(2 -> 1, k=7).weight
    bconv = jax.random.normal(k6, (1,), jnp.float32) * 0.1      # Conv2d bias

    # BatchNorm2d(1) eval-mode parameters (defaults; now real inputs, not hard-coded).
    bn_gamma = jnp.ones((1,), jnp.float32)
    bn_beta = jnp.zeros((1,), jnp.float32)
    bn_mean = jnp.zeros((1,), jnp.float32)
    bn_var = jnp.ones((1,), jnp.float32)

    x = jax.random.normal(kx, (N, C, H, W), jnp.float32)

    out = cbam_forward(x, w1, b1, w2, b2, wconv, bconv, bn_gamma, bn_beta, bn_mean, bn_var)
    out = jax.block_until_ready(out)

    ref = jax.block_until_ready(
        cbam_reference(x, w1, b1, w2, b2, wconv, bconv, bn_gamma, bn_beta, bn_mean, bn_var))

    assert out.shape == (N, C, H, W)
    assert jnp.allclose(out, ref, atol=1e-3, rtol=1e-3), "Pallas CBAM mismatch vs reference"

    print("KERNEL_OK")
</pallas_src>

<mosaic_0001>
module attributes {stable_mosaic.version = 11 : i64} {
  func.func @cbam_kernel(%arg0: i32, %arg1: memref<1x16x256xf32, #tpu.memory_space<vmem>>, %arg2: memref<4x16xf32, #tpu.memory_space<vmem>>, %arg3: memref<16x4xf32, #tpu.memory_space<vmem>>, %arg4: memref<16x2xf32, #tpu.memory_space<vmem>>, %arg5: memref<2x256x256xf32, #tpu.memory_space<vmem>>, %arg6: memref<1xf32, #tpu.memory_space<smem>>, %arg7: memref<1x16x256xf32, #tpu.memory_space<vmem>>) attributes {dimension_semantics = [#tpu.dimension_semantics<parallel>], iteration_bounds = array<i64: 2>, scalar_prefetch = 0 : i64, scratch_operands = 0 : i64, tpu.core_type = #tpu.core_type<tc>, window_params = [{transform_indices = @transform_0, window_bounds = array<i64: 1, 16, 256>}, {pipeline_mode = #tpu.pipeline_mode<synchronous>, transform_indices = @transform_1, window_bounds = array<i64: 4, 16>}, {pipeline_mode = #tpu.pipeline_mode<synchronous>, transform_indices = @transform_2, window_bounds = array<i64: 16, 4>}, {pipeline_mode = #tpu.pipeline_mode<synchronous>, transform_indices = @transform_3, window_bounds = array<i64: 16, 2>}, {pipeline_mode = #tpu.pipeline_mode<synchronous>, transform_indices = @transform_4, window_bounds = array<i64: 2, 256, 256>}, {transform_indices = @transform_5, window_bounds = array<i64: 1>}, {transform_indices = @transform_6, window_bounds = array<i64: 1, 16, 256>}]} {
    %c0 = arith.constant 0 : index
    %c0_0 = arith.constant 0 : index
    %c0_1 = arith.constant 0 : index
    %0 = vector.load %arg1[%c0, %c0_0, %c0_1] : memref<1x16x256xf32, #tpu.memory_space<vmem>>, vector<1x16x256xf32>
    %1 = vector.shape_cast %0 : vector<1x16x256xf32> to vector<16x256xf32>
    %cst = arith.constant dense<0.000000e+00> : vector<16xf32>
    %2 = vector.multi_reduction <add>, %1, %cst [1] : vector<16x256xf32> to vector<16xf32>
    %3 = vector.shape_cast %2 : vector<16xf32> to vector<16x1xf32>
    %cst_2 = arith.constant 3.906250e-03 : f32
    %4 = vector.broadcast %cst_2 : f32 to vector<16x1xf32>
    %5 = arith.mulf %3, %4 : vector<16x1xf32>
    %cst_3 = arith.constant dense<0xFF800000> : vector<16xf32>
    %6 = vector.multi_reduction <maximumf>, %1, %cst_3 [1] : vector<16x256xf32> to vector<16xf32>
    %7 = vector.shape_cast %6 : vector<16xf32> to vector<16x1xf32>
    %c0_4 = arith.constant 0 : index
    %c0_5 = arith.constant 0 : index
    %8 = vector.load %arg2[%c0_4, %c0_5] : memref<4x16xf32, #tpu.memory_space<vmem>>, vector<4x16xf32>
    %c0_6 = arith.constant 0 : index
    %c0_7 = arith.constant 0 : index
    %9 = vector.load %arg3[%c0_6, %c0_7] : memref<16x4xf32, #tpu.memory_space<vmem>>, vector<16x4xf32>
    %c0_8 = arith.constant 0 : index
    %c0_9 = arith.constant 0 : index
    %10 = vector.load %arg4[%c0_8, %c0_9] : memref<16x2xf32, #tpu.memory_space<vmem>>, vector<16x1xf32>
    %c0_10 = arith.constant 0 : index
    %c1 = arith.constant 1 : index
    %11 = vector.load %arg4[%c0_10, %c1] : memref<16x2xf32, #tpu.memory_space<vmem>>, vector<4x1xf32>
    %cst_11 = arith.constant dense<0.000000e+00> : vector<4x1xf32>
    %12 = tpu.matmul %8, %5, %cst_11 {dimension_numbers = #tpu.dot_dimension_numbers<[1], [0], [0], [1], [0, 0, 1, 1], [], []>} : vector<4x16xf32>, vector<16x1xf32>, vector<4x1xf32> -> vector<4x1xf32>
    %13 = arith.addf %12, %11 : vector<4x1xf32>
    %cst_12 = arith.constant 0.000000e+00 : f32
    %14 = vector.broadcast %cst_12 : f32 to vector<4x1xf32>
    %15 = arith.maximumf %13, %14 : vector<4x1xf32>
    %cst_13 = arith.constant dense<0.000000e+00> : vector<16x1xf32>
    %16 = tpu.matmul %9, %15, %cst_13 {dimension_numbers = #tpu.dot_dimension_numbers<[1], [0], [0], [1], [0, 0, 1, 1], [], []>} : vector<16x4xf32>, vector<4x1xf32>, vector<16x1xf32> -> vector<16x1xf32>
    %17 = arith.addf %16, %10 : vector<16x1xf32>
    %cst_14 = arith.constant dense<0.000000e+00> : vector<4x1xf32>
    %18 = tpu.matmul %8, %7, %cst_14 {dimension_numbers = #tpu.dot_dimension_numbers<[1], [0], [0], [1], [0, 0, 1, 1], [], []>} : vector<4x16xf32>, vector<16x1xf32>, vector<4x1xf32> -> vector<4x1xf32>
    %19 = arith.addf %18, %11 : vector<4x1xf32>
    %cst_15 = arith.constant 0.000000e+00 : f32
    %20 = vector.broadcast %cst_15 : f32 to vector<4x1xf32>
    %21 = arith.maximumf %19, %20 : vector<4x1xf32>
    %cst_16 = arith.constant dense<0.000000e+00> : vector<16x1xf32>
    %22 = tpu.matmul %9, %21, %cst_16 {dimension_numbers = #tpu.dot_dimension_numbers<[1], [0], [0], [1], [0, 0, 1, 1], [], []>} : vector<16x4xf32>, vector<4x1xf32>, vector<16x1xf32> -> vector<16x1xf32>
    %23 = arith.addf %22, %10 : vector<16x1xf32>
    %24 = arith.addf %17, %23 : vector<16x1xf32>
    %25 = arith.negf %24 : vector<16x1xf32>
    %26 = math.exp %25 : vector<16x1xf32>
    %cst_17 = arith.constant 1.000000e+00 : f32
    %27 = vector.broadcast %cst_17 : f32 to vector<16x1xf32>
    %28 = arith.addf %27, %26 : vector<16x1xf32>
    %29 = arith.divf %27, %28 : vector<16x1xf32>
    %30 = vector.broadcast %29 : vector<16x1xf32> to vector<16x256xf32>
    %31 = arith.mulf %1, %30 : vector<16x256xf32>
    %cst_18 = arith.constant dense<0.000000e+00> : vector<256xf32>
    %32 = vector.multi_reduction <add>, %31, %cst_18 [0] : vector<16x256xf32> to vector<256xf32>
    %33 = vector.shape_cast %32 : vector<256xf32> to vector<1x256xf32>
    %cst_19 = arith.constant 6.250000e-02 : f32
    %34 = vector.broadcast %cst_19 : f32 to vector<1x256xf32>
    %35 = arith.mulf %33, %34 : vector<1x256xf32>
    %cst_20 = arith.constant dense<0xFF800000> : vector<256xf32>
    %36 = vector.multi_reduction <maximumf>, %31, %cst_20 [0] : vector<16x256xf32> to vector<256xf32>
    %37 = vector.shape_cast %36 : vector<256xf32> to vector<1x256xf32>
    %c0_21 = arith.constant 0 : index
    %c0_22 = arith.constant 0 : index
    %c0_23 = arith.constant 0 : index
    %38 = vector.load %arg5[%c0_21, %c0_22, %c0_23] : memref<2x256x256xf32, #tpu.memory_space<vmem>>, vector<1x256x256xf32>
    %39 = vector.shape_cast %38 : vector<1x256x256xf32> to vector<256x256xf32>
    %cst_24 = arith.constant dense<0.000000e+00> : vector<1x256xf32>
    %40 = tpu.matmul %35, %39, %cst_24 {dimension_numbers = #tpu.dot_dimension_numbers<[1], [0], [0], [1], [0, 0, 1, 1], [], []>} : vector<1x256xf32>, vector<256x256xf32>, vector<1x256xf32> -> vector<1x256xf32>
    %c1_25 = arith.constant 1 : index
    %c0_26 = arith.constant 0 : index
    %c0_27 = arith.constant 0 : index
    %41 = vector.load %arg5[%c1_25, %c0_26, %c0_27] : memref<2x256x256xf32, #tpu.memory_space<vmem>>, vector<1x256x256xf32>
    %42 = vector.shape_cast %41 : vector<1x256x256xf32> to vector<256x256xf32>
    %cst_28 = arith.constant dense<0.000000e+00> : vector<1x256xf32>
    %43 = tpu.matmul %37, %42, %cst_28 {dimension_numbers = #tpu.dot_dimension_numbers<[1], [0], [0], [1], [0, 0, 1, 1], [], []>} : vector<1x256xf32>, vector<256x256xf32>, vector<1x256xf32> -> vector<1x256xf32>
    %44 = arith.addf %40, %43 : vector<1x256xf32>
    %c0_29 = arith.constant 0 : index
    %45 = memref.load %arg6[%c0_29] : memref<1xf32, #tpu.memory_space<smem>>
    %46 = vector.broadcast %45 : f32 to vector<1x256xf32>
    %47 = arith.addf %44, %46 : vector<1x256xf32>
    %48 = arith.negf %47 : vector<1x256xf32>
    %49 = math.exp %48 : vector<1x256xf32>
    %cst_30 = arith.constant 1.000000e+00 : f32
    %50 = vector.broadcast %cst_30 : f32 to vector<1x256xf32>
    %51 = arith.addf %50, %49 : vector<1x256xf32>
    %52 = arith.divf %50, %51 : vector<1x256xf32>
    %53 = vector.broadcast %52 : vector<1x256xf32> to vector<16x256xf32>
    %54 = arith.mulf %31, %53 : vector<16x256xf32>
    %c0_31 = arith.constant 0 : index
    %c0_32 = arith.constant 0 : index
    %c0_33 = arith.constant 0 : index
    %55 = vector.load %arg7[%c0_31, %c0_32, %c0_33] : memref<1x16x256xf32, #tpu.memory_space<vmem>>, vector<1x16x256xf32>
    %56 = vector.shape_cast %55 : vector<1x16x256xf32> to vector<16x256xf32>
    %57 = vector.shape_cast %54 : vector<16x256xf32> to vector<1x16x256xf32>
    tpu.vector_store %arg7[%c0_31, %c0_32, %c0_33], %57 {strides = array<i32>} : memref<1x16x256xf32, #tpu.memory_space<vmem>>, vector<1x16x256xf32>,
    return
  }
  func.func @transform_0(%arg0: i32) -> (i32, i32, i32) {
    %c0_i32 = arith.constant 0 : i32
    %c0_i32_0 = arith.constant 0 : i32
    %c0_i32_1 = arith.constant 0 : i32
    return %arg0, %c0_i32, %c0_i32_0 : i32, i32, i32
  }
  func.func @transform_1(%arg0: i32) -> (i32, i32) {
    %c0_i32 = arith.constant 0 : i32
    %c0_i32_0 = arith.constant 0 : i32
    %c0_i32_1 = arith.constant 0 : i32
    return %c0_i32, %c0_i32_0 : i32, i32
  }
  func.func @transform_2(%arg0: i32) -> (i32, i32) {
    %c0_i32 = arith.constant 0 : i32
    %c0_i32_0 = arith.constant 0 : i32
    %c0_i32_1 = arith.constant 0 : i32
    return %c0_i32, %c0_i32_0 : i32, i32
  }
  func.func @transform_3(%arg0: i32) -> (i32, i32) {
    %c0_i32 = arith.constant 0 : i32
    %c0_i32_0 = arith.constant 0 : i32
    %c0_i32_1 = arith.constant 0 : i32
    return %c0_i32, %c0_i32_0 : i32, i32
  }
  func.func @transform_4(%arg0: i32) -> (i32, i32, i32) {
    %c0_i32 = arith.constant 0 : i32
    %c0_i32_0 = arith.constant 0 : i32
    %c0_i32_1 = arith.constant 0 : i32
    %c0_i32_2 = arith.constant 0 : i32
    return %c0_i32, %c0_i32_0, %c0_i32_1 : i32, i32, i32
  }
  func.func @transform_5(%arg0: i32) -> i32 {
    %c0_i32 = arith.constant 0 : i32
    %c0_i32_0 = arith.constant 0 : i32
    return %c0_i32 : i32
  }
  func.func @transform_6(%arg0: i32) -> (i32, i32, i32) {
    %c0_i32 = arith.constant 0 : i32
    %c0_i32_0 = arith.constant 0 : i32
    %c0_i32_1 = arith.constant 0 : i32
    return %arg0, %c0_i32, %c0_i32_0 : i32, i32, i32
  }
}

</mosaic_0001>

<llo_original>
// kernel: cbam_forward.1
$region0: #{cbam_forward.1}
  #allocation0 [shape = 'u32[]', space=smem, size = 0x4, offset = 0x4, fixed_abs, tag = 'smem constant byte address 0x4 - core index']
  #allocation1 [shape = 'u32[144,128]{1,0:T(1,128)}', space=vmem, size = 0x12000, scoped, tag = 'internal scratch']
  #allocation2 [shape = 'f32[1]{0:T(128)S(6)}', space=smem, size = 0x200, scoped, tag = 'scoped memory for cbam_forward.1']
  %s0 = inlined_call_operand.vmem [shape: f32[2,16,256], index: 0, kind: input, shape index: {}]
  %s1 = inlined_call_operand.vmem [shape: f32[4,16], index: 1, kind: input, shape index: {}]
  %s2 = inlined_call_operand.vmem [shape: f32[16,4], index: 2, kind: input, shape index: {}]
  %s3 = inlined_call_operand.vmem [shape: f32[16,2], index: 3, kind: input, shape index: {}]
  %s4 = inlined_call_operand.vmem [shape: f32[2,256,256], index: 4, kind: input, shape index: {}]
  %s5 = inlined_call_operand.<no memory space> [shape: f32[1], index: 5, kind: input, shape index: {}]
  %s6 = inlined_call_operand.vmem [shape: f32[2,16,256], index: 6, kind: output, shape index: {}]
  %s7 = sld [smem:[#allocation0]]
  $region57: #{cbam_forward.1} parent=0
    _
  %s9 = ssub.s32 1, %s7
  %s10 = scalar_select 0, %s9, %s7
  %11 = sst [smem:[#allocation2]] %s5
  loop: start=0, step=1, limit=4
  $region2: #{cbam_forward.1} parent=0 // loop_pre_header
    _
  $region3: #{cbam_forward.1} parent=0 // loop_header
    %s13 = sphi 0, %s17
    %p14 = scmp.ge.s32.totalorder %s13, 4
    %s23 = sphi 0, %s25
    %s26 = sphi 0, %s23
    %s27 = sphi 0, %s26
    %s43 = sphi 0, %s27
    %s47 = sphi 0, %s47
    %s49 = sphi 0, %s47
    %s50 = sphi 0, %s49
    %s64 = sphi 0, %s50
    %s68 = sphi 0, %s68
    %s70 = sphi 0, %s68
    %s71 = sphi 0, %s70
    %s85 = sphi 0, %s71
    %s89 = sphi 0, %s89
    %s91 = sphi 0, %s89
    %s92 = sphi 0, %s91
    %s106 = sphi 0, %s92
    %s110 = sphi 0, %s110
    %s112 = sphi 0, %s110
    %s113 = sphi 0, %s112
    %s127 = sphi 0, %s113
    %s131 = sphi 0, %s131
    %s133 = sphi 0, %s131
    %s134 = sphi 0, %s133
    %s148 = sphi 0, %s134
    %s154 = sphi 0, %s156
    %s157 = sphi 0, %s154
    %s158 = sphi 0, %s157
    %s174 = sphi 0, %s158
  $region4: #{cbam_forward.1} parent=0 // loop_header_branch
    %16 = sbr.rel (%p14) target = $region8
  $region5: #{cbam_forward.1} parent=0 // loop_body
    %s18 = ssub.s32 %s13, 1
    %s19 = ssub.s32 %s13, 2
    %s20 = sadd.s32 %s13, 1
    %s21 = ssub.s32 %s13, %s20
    %p22 = scmp.eq.s32.totalorder %s21, 0
    %s24 = sadd.s32 %s23, 1
    %s25 = scalar_select %p22, %s23, %s24
    %p28 = pneg %p22
    %p29 = scmp.eq.s32.totalorder %s13, 1
    %p30 = por %p28, %p29
    %p31 = scmp.ne.s32.totalorder %s23, %s26
    %p32 = scmp.eq.s32.totalorder %s13, 0
    %p33 = por %p31, %p32
    %p34 = scmp.ne.s32.totalorder %s23, %s26
    %p35 = scmp.eq.s32.totalorder %s18, 1
    %p36 = por %p34, %p35
    %p37 = scmp.ne.s32.totalorder %s26, %s27
    %p38 = scmp.eq.s32.totalorder %s18, 0
    %p39 = por %p37, %p38
    %p40 = scmp.ne.s32.totalorder %s26, %s27
    %p41 = scmp.eq.s32.totalorder %s19, 1
    %p42 = por %p40, %p41
    %p44 = scmp.ne.s32.totalorder %s27, %s43
    %p45 = scmp.eq.s32.totalorder %s19, 0
    %p46 = por %p44, %p45
    %s48 = sadd.s32 %s47, 1
    %p51 = scmp.eq.s32.totalorder %s13, 1
    %p52 = scmp.ne.s32.totalorder %s47, %s49
    %p53 = scmp.eq.s32.totalorder %s13, 0
    %p54 = por %p52, %p53
    %p55 = scmp.ne.s32.totalorder %s47, %s49
    %p56 = scmp.eq.s32.totalorder %s18, 1
    %p57 = por %p55, %p56
    %p58 = scmp.ne.s32.totalorder %s49, %s50
    %p59 = scmp.eq.s32.totalorder %s18, 0
    %p60 = por %p58, %p59
    %p61 = scmp.ne.s32.totalorder %s49, %s50
    %p62 = scmp.eq.s32.totalorder %s19, 1
    %p63 = por %p61, %p62
    %p65 = scmp.ne.s32.totalorder %s50, %s64
    %p66 = scmp.eq.s32.totalorder %s19, 0
    %p67 = por %p65, %p66
    %s69 = sadd.s32 %s68, 1
    %p72 = scmp.eq.s32.totalorder %s13, 1
    %p73 = scmp.ne.s32.totalorder %s68, %s70
    %p74 = scmp.eq.s32.totalorder %s13, 0
    %p75 = por %p73, %p74
    %p76 = scmp.ne.s32.totalorder %s68, %s70
    %p77 = scmp.eq.s32.totalorder %s18, 1
    %p78 = por %p76, %p77
    %p79 = scmp.ne.s32.totalorder %s70, %s71
    %p80 = scmp.eq.s32.totalorder %s18, 0
    %p81 = por %p79, %p80
    %p82 = scmp.ne.s32.totalorder %s70, %s71
    %p83 = scmp.eq.s32.totalorder %s19, 1
    %p84 = por %p82, %p83
    %p86 = scmp.ne.s32.totalorder %s71, %s85
    %p87 = scmp.eq.s32.totalorder %s19, 0
    %p88 = por %p86, %p87
    %s90 = sadd.s32 %s89, 1
    %p93 = scmp.eq.s32.totalorder %s13, 1
    %p94 = scmp.ne.s32.totalorder %s89, %s91
    %p95 = scmp.eq.s32.totalorder %s13, 0
    %p96 = por %p94, %p95
    %p97 = scmp.ne.s32.totalorder %s89, %s91
    %p98 = scmp.eq.s32.totalorder %s18, 1
    %p99 = por %p97, %p98
    %p100 = scmp.ne.s32.totalorder %s91, %s92
    %p101 = scmp.eq.s32.totalorder %s18, 0
    %p102 = por %p100, %p101
    %p103 = scmp.ne.s32.totalorder %s91, %s92
    %p104 = scmp.eq.s32.totalorder %s19, 1
    %p105 = por %p103, %p104
    %p107 = scmp.ne.s32.totalorder %s92, %s106
    %p108 = scmp.eq.s32.totalorder %s19, 0
    %p109 = por %p107, %p108
    %s111 = sadd.s32 %s110, 1
    %p114 = scmp.eq.s32.totalorder %s13, 1
    %p115 = scmp.ne.s32.totalorder %s110, %s112
    %p116 = scmp.eq.s32.totalorder %s13, 0
    %p117 = por %p115, %p116
    %p118 = scmp.ne.s32.totalorder %s110, %s112
    %p119 = scmp.eq.s32.totalorder %s18, 1
    %p120 = por %p118, %p119
    %p121 = scmp.ne.s32.totalorder %s112, %s113
    %p122 = scmp.eq.s32.totalorder %s18, 0
    %p123 = por %p121, %p122
    %p124 = scmp.ne.s32.totalorder %s112, %s113
    %p125 = scmp.eq.s32.totalorder %s19, 1
    %p126 = por %p124, %p125
    %p128 = scmp.ne.s32.totalorder %s113, %s127
    %p129 = scmp.eq.s32.totalorder %s19, 0
    %p130 = por %p128, %p129
    %s132 = sadd.s32 %s131, 1
    %p135 = scmp.eq.s32.totalorder %s13, 1
    %p136 = scmp.ne.s32.totalorder %s131, %s133
    %p137 = scmp.eq.s32.totalorder %s13, 0
    %p138 = por %p136, %p137
    %p139 = scmp.ne.s32.totalorder %s131, %s133
    %p140 = scmp.eq.s32.totalorder %s18, 1
    %p141 = por %p139, %p140
    %p142 = scmp.ne.s32.totalorder %s133, %s134
    %p143 = scmp.eq.s32.totalorder %s18, 0
    %p144 = por %p142, %p143
    %p145 = scmp.ne.s32.totalorder %s133, %s134
    %p146 = scmp.eq.s32.totalorder %s19, 1
    %p147 = por %p145, %p146
    %p149 = scmp.ne.s32.totalorder %s134, %s148
    %p150 = scmp.eq.s32.totalorder %s19, 0
    %p151 = por %p149, %p150
    %s152 = ssub.s32 %s13, %s20
    %p153 = scmp.eq.s32.totalorder %s152, 0
    %s155 = sadd.s32 %s154, 1
    %s156 = scalar_select %p153, %s154, %s155
    %p159 = pneg %p153
    %p160 = scmp.eq.s32.totalorder %s13, 1
    %p161 = por %p159, %p160
    %p162 = scmp.ne.s32.totalorder %s154, %s157
    %p163 = scmp.eq.s32.totalorder %s13, 0
    %p164 = por %p162, %p163
    %p165 = scmp.ne.s32.totalorder %s154, %s157
    %p166 = scmp.eq.s32.totalorder %s18, 1
    %p167 = por %p165, %p166
    %p168 = scmp.ne.s32.totalorder %s157, %s158
    %p169 = scmp.eq.s32.totalorder %s18, 0
    %p170 = por %p168, %p169
    %p171 = scmp.ne.s32.totalorder %s157, %s158
    %p172 = scmp.eq.s32.totalorder %s19, 1
    %p173 = por %p171, %p172
    %p175 = scmp.ne.s32.totalorder %s158, %s174
    %p176 = scmp.eq.s32.totalorder %s19, 0
    %p177 = por %p175, %p176
    %p178 = scmp.le.s32.totalorder 1, %s13
    %p179 = scmp.lt.s32.totalorder %s13, 3
    %p180 = pnand %p178, %p179
    %p181 = pneg %p180
    // Predicated region
    $region9: #{cbam_forward.1} parent=5 // pred_check
      _
    $region10: #{cbam_forward.1} parent=5 // pred_check_branch
      %183 = sbr.rel (%p180) target = $region12
    $region11: #{cbam_forward.1} parent=5 // pred_region
      %s184 = ssub.s32 %s13, 1
      // Predicated region
      $region13: #{cbam_forward.1} parent=11 // pred_check
        %p185 = pneg %p60
      $region14: #{cbam_forward.1} parent=11 // pred_check_branch
        %187 = sbr.rel (%p185) target = $region16
      $region15: #{cbam_forward.1} parent=11 // pred_region
        _
      $region16: #{cbam_forward.1} parent=11 // pred_fallthru
        _
      // Predicated region
      $region17: #{cbam_forward.1} parent=11 // pred_check
        %p188 = pneg %p81
      $region18: #{cbam_forward.1} parent=11 // pred_check_branch
        %190 = sbr.rel (%p188) target = $region20
      $region19: #{cbam_forward.1} parent=11 // pred_region
        _
      $region20: #{cbam_forward.1} parent=11 // pred_fallthru
        _
      // Predicated region
      $region21: #{cbam_forward.1} parent=11 // pred_check
        %p191 = pneg %p102
      $region22: #{cbam_forward.1} parent=11 // pred_check_branch
        %193 = sbr.rel (%p191) target = $region24
      $region23: #{cbam_forward.1} parent=11 // pred_region
        _
      $region24: #{cbam_forward.1} parent=11 // pred_fallthru
        _
      // Predicated region
      $region25: #{cbam_forward.1} parent=11 // pred_check
        %p194 = pneg %p123
      $region26: #{cbam_forward.1} parent=11 // pred_check_branch
        %196 = sbr.rel (%p194) target = $region28
      $region27: #{cbam_forward.1} parent=11 // pred_region
        _
      $region28: #{cbam_forward.1} parent=11 // pred_fallthru
        _
      // Predicated region
      $region29: #{cbam_forward.1} parent=11 // pred_check
        %p197 = pneg %p144
      $region30: #{cbam_forward.1} parent=11 // pred_check_branch
        %199 = sbr.rel (%p197) target = $region32
      $region31: #{cbam_forward.1} parent=11 // pred_region
        _
      $region32: #{cbam_forward.1} parent=11 // pred_fallthru
        _
    $region12: #{cbam_forward.1} parent=5 // pred_fallthru
      _
    %p200 = scmp.lt.s32.totalorder %s13, 2
    // Predicated region
    $region33: #{cbam_forward.1} parent=5 // pred_check
      %p201 = pneg %p200
    $region34: #{cbam_forward.1} parent=5 // pred_check_branch
      %203 = sbr.rel (%p201) target = $region36
    $region35: #{cbam_forward.1} parent=5 // pred_region
      // Predicated region
      $region37: #{cbam_forward.1} parent=35 // pred_check
        %p204 = pneg %p33
      $region38: #{cbam_forward.1} parent=35 // pred_check_branch
        %206 = sbr.rel (%p204) target = $region40
      $region39: #{cbam_forward.1} parent=35 // pred_region
        %p207 = scmp.lt.s32.totalorder %s13, 1
        %s208 = scalar_select %p207, %s13, 1
        %s209 = smul.addr %s208, 4
        %s210 = smul.addr %s209, 8
        %s211 = scalar_lea.vmem %s0, %s210
      $region40: #{cbam_forward.1} parent=35 // pred_fallthru
        _
    $region36: #{cbam_forward.1} parent=5 // pred_fallthru
      _
    %p212 = scmp.le.s32.totalorder 1, %s13
    %p213 = scmp.lt.s32.totalorder %s13, 3
    %p214 = pnand %p212, %p213
    %p215 = pneg %p214
    // Predicated region
    $region41: #{cbam_forward.1} parent=5 // pred_check
      _
    $region42: #{cbam_forward.1} parent=5 // pred_check_branch
      %217 = sbr.rel (%p214) target = $region44
    $region43: #{cbam_forward.1} parent=5 // pred_region
      %s218 = ssub.s32 %s13, 1
      %p219 = scmp.lt.s32.totalorder %s18, 1
      %s220 = scalar_select %p219, %s18, 1
      %s221 = smul.addr %s220, 4
      %s222 = smul.addr %s221, 8
      %s223 = scalar_lea.vmem %s0, %s222
      %p224 = pneg %p39
      %p225 = pneg %p36
      %p226 = pneg %p60
      %p227 = pneg %p57
      %p228 = pneg %p81
      %p229 = pneg %p78
      %p230 = pneg %p102
      %p231 = pneg %p99
      %p232 = pneg %p123
      %p233 = pneg %p120
      %p234 = pneg %p144
      %p235 = pneg %p141
      %p236 = pneg %p170
      %p237 = pneg %p167
      %p238 = scmp.lt.s32.totalorder %s18, 1
      %s239 = scalar_select %p238, %s18, 1
      %s240 = smul.addr %s239, 4
      %s241 = smul.addr %s240, 8
      %s242 = scalar_lea.vmem %s6, %s241
      %p243 = scmp.lt.s32.totalorder %s18, 1
      %s244 = scalar_select %p243, %s18, 1
      %s245 = smul.addr %s244, 4
      %s246 = smul.addr %s245, 8
      %s247 = scalar_lea.vmem %s0, %s246
      %p248 = scmp.lt.s32.totalorder %s18, 1
      %s249 = scalar_select %p248, %s18, 1
      %s250 = smul.addr %s249, 4
      %s251 = smul.addr %s250, 8
      %s252 = scalar_lea.vmem %s6, %s251
      %v253 = vld [vmem:[%s247] sm:$0xff]
      %v254 = vld [vmem:[%s247 + $0x8] sm:$0xff]
      %v255 = vld [vmem:[%s247 + $0x10] sm:$0xff]
      %v256 = vld [vmem:[%s247 + $0x18] sm:$0xff]
      %v257 = vadd.f32 %v253, %v254
      %258 = vadd.xlane.f32.xlu0 %v257
      %v259 = vpop.xlane.xlu0 %258
      %v260 = vadd.f32 %v255, %v256
      %261 = vadd.xlane.f32.xlu0 %v260
      %v262 = vpop.xlane.xlu0 %261
      %v263 = vmul.f32 %v259, 0.00390625
      %v264 = vmul.f32 %v262, 0.00390625
      %v265 = vmax.f32 %v253, %v254
      %266 = vmax.xlane.f32.xlu0 %v265
      %v267 = vpop.xlane.xlu0 %266
      %v268 = vmax.f32 %v255, %v256
      %269 = vmax.xlane.f32.xlu0 %v268
      %v270 = vpop.xlane.xlu0 %269
      %v271 = vld [vmem:[%s1] sm:$0xf]
      %v272 = vld [vmem:[%s2] sm:$0xff]
      %v273 = vld [vmem:[%s2 + $0x8] sm:$0xff]
      %v274 = vld [vmem:[%s3] sm:$0xff]
      %v275 = vld [vmem:[%s3 + $0x8] sm:$0xff]
      %v276 = vld [vmem:[%s3] sm:$0xf]
      %278 = vrot.lane.b32.xlu0 %v276, 127
      %v279 = vpop.permute.xlu0 %278
      %vm281 = vcmask 130048
      %v283 = vsel %vm281, %v271, 0
      %285 = vmatprep.subr.mxu0 0.0
      %286 = vmatpush1.msra.mxu0 %v263
      %287 = vmatprep.subr.mxu0 0.0
      %288 = vmatpush1.msra.mxu0 %v264
      %289 = vmatprep.subr.mxu0 0.0
      %290 = vmatpush1.msra.mxu0 0.0
      %291 = vmatprep.subr.mxu0 0.0
      %292 = vmatpush1.msra.mxu0 0.0
      %293 = vmatprep.subr.mxu0 0.0
      %294 = vmatpush1.msra.mxu0 0.0
      %295 = vmatprep.subr.mxu0 0.0
      %296 = vmatpush1.msra.mxu0 0.0
      %297 = vmatprep.subr.mxu0 0.0
      %298 = vmatpush1.msra.mxu0 0.0
      %299 = vmatprep.subr.mxu0 0.0
      %300 = vmatpush1.msra.mxu0 0.0
      %301 = vmatprep.subr.mxu0 0.0
      %302 = vmatpush1.msra.mxu0 0.0
      %303 = vmatprep.subr.mxu0 0.0
      %304 = vmatpush1.msra.mxu0 0.0
      %305 = vmatprep.subr.mxu0 0.0
      %306 = vmatpush1.msra.mxu0 0.0
      %307 = vmatprep.subr.mxu0 0.0
      %308 = vmatpush1.msra.mxu0 0.0
      %309 = vmatprep.subr.mxu0 0.0
      %310 = vmatpush1.msra.mxu0 0.0
      %311 = vmatprep.subr.mxu0 0.0
      %312 = vmatpush1.msra.mxu0 0.0
      %313 = vmatprep.subr.mxu0 0.0
      %314 = vmatpush1.msra.mxu0 0.0
      %315 = vmatprep.subr.mxu0 0.0
      %316 = vmatpush1.msra.mxu0 0.0
      %317 = vmatprep.subr.mxu0 0.0
      %318 = vmatpush1.msra.mxu0 0.0
      %319 = vmatprep.subr.mxu0 0.0
      %320 = vmatpush1.msra.mxu0 0.0
      %321 = vmatprep.subr.mxu0 0.0
      %322 = vmatpush1.msra.mxu0 0.0
      %323 = vmatprep.subr.mxu0 0.0
      %324 = vmatpush1.msra.mxu0 0.0
      %325 = vmatprep.subr.mxu0 0.0
      %326 = vmatpush1.msra.mxu0 0.0
      %327 = vmatprep.subr.mxu0 0.0
      %328 = vmatpush1.msra.mxu0 0.0
      %329 = vmatprep.subr.mxu0 0.0
      %330 = vmatpush1.msra.mxu0 0.0
      %331 = vmatprep.subr.mxu0 0.0
      %332 = vmatpush1.msra.mxu0 0.0
      %333 = vmatprep.subr.mxu0 0.0
      %334 = vmatpush1.msra.mxu0 0.0
      %335 = vmatprep.subr.mxu0 0.0
      %336 = vmatpush1.msra.mxu0 0.0
      %337 = vmatprep.subr.mxu0 0.0
      %338 = vmatpush1.msra.mxu0 0.0
      %339 = vmatprep.subr.mxu0 0.0
      %340 = vmatpush1.msra.mxu0 0.0
      %341 = vmatprep.subr.mxu0 0.0
      %342 = vmatpush1.msra.mxu0 0.0
      %343 = vmatprep.subr.mxu0 0.0
      %344 = vmatpush1.msra.mxu0 0.0
      %345 = vmatprep.subr.mxu0 0.0
      %346 = vmatpush1.msra.mxu0 0.0
      %347 = vmatprep.subr.mxu0 0.0
      %348 = vmatpush1.msra.mxu0 0.0
      %349 = vmatprep.mubr.f32.mxu0 0.0
      %350 = vmatmul.mubr.f32.gmra.mrb[0].mxu0 %v283
      %v351 = vpop.f32.mrb[0].mxu0
      %v352 = vadd.f32 %v279, %v351
      %v353 = vpop.f32.mrb[0].mxu0
      %354 = vdwg.mxu0
      %v355 = vmax.f32 %v352, 0.0
      %vm356 = vcmask 31744
      %v358 = vsel %vm356, %v272, 0
      %v361 = vsel %vm356, %v273, 0
      %vm363 = vcmask 1043456
      %v365 = vsel %vm363, %v355, 0
      %367 = vmatprep.subr.mxu0 0.0
      %368 = vmatpush1.msra.mxu0 %v365
      %369 = vmatprep.subr.mxu0 0.0
      %370 = vmatpush1.msra.mxu0 0.0
      %371 = vmatprep.subr.mxu0 0.0
      %372 = vmatpush1.msra.mxu0 0.0
      %373 = vmatprep.subr.mxu0 0.0
      %374 = vmatpush1.msra.mxu0 0.0
      %375 = vmatprep.subr.mxu0 0.0
      %376 = vmatpush1.msra.mxu0 0.0
      %377 = vmatprep.subr.mxu0 0.0
      %378 = vmatpush1.msra.mxu0 0.0
      %379 = vmatprep.subr.mxu0 0.0
      %380 = vmatpush1.msra.mxu0 0.0
      %381 = vmatprep.subr.mxu0 0.0
      %382 = vmatpush1.msra.mxu0 0.0
      %383 = vmatprep.subr.mxu0 0.0
      %384 = vmatpush1.msra.mxu0 0.0
      %385 = vmatprep.subr.mxu0 0.0
      %386 = vmatpush1.msra.mxu0 0.0
      %387 = vmatprep.subr.mxu0 0.0
      %388 = vmatpush1.msra.mxu0 0.0
      %389 = vmatprep.subr.mxu0 0.0
      %390 = vmatpush1.msra.mxu0 0.0
      %391 = vmatprep.subr.mxu0 0.0
      %392 = vmatpush1.msra.mxu0 0.0
      %393 = vmatprep.subr.mxu0 0.0
      %394 = vmatpush1.msra.mxu0 0.0
      %395 = vmatprep.subr.mxu0 0.0
      %396 = vmatpush1.msra.mxu0 0.0
      %397 = vmatprep.subr.mxu0 0.0
      %398 = vmatpush1.msra.mxu0 0.0
      %399 = vmatprep.subr.mxu0 0.0
      %400 = vmatpush1.msra.mxu0 0.0
      %401 = vmatprep.subr.mxu0 0.0
      %402 = vmatpush1.msra.mxu0 0.0
      %403 = vmatprep.subr.mxu0 0.0
      %404 = vmatpush1.msra.mxu0 0.0
      %405 = vmatprep.subr.mxu0 0.0
      %406 = vmatpush1.msra.mxu0 0.0
      %407 = vmatprep.subr.mxu0 0.0
      %408 = vmatpush1.msra.mxu0 0.0
      %409 = vmatprep.subr.mxu0 0.0
      %410 = vmatpush1.msra.mxu0 0.0
      %411 = vmatprep.subr.mxu0 0.0
      %412 = vmatpush1.msra.mxu0 0.0
      %413 = vmatprep.subr.mxu0 0.0
      %414 = vmatpush1.msra.mxu0 0.0
      %415 = vmatprep.subr.mxu0 0.0
      %416 = vmatpush1.msra.mxu0 0.0
      %417 = vmatprep.subr.mxu0 0.0
      %418 = vmatpush1.msra.mxu0 0.0
      %419 = vmatprep.subr.mxu0 0.0
      %420 = vmatpush1.msra.mxu0 0.0
      %421 = vmatprep.subr.mxu0 0.0
      %422 = vmatpush1.msra.mxu0 0.0
      %423 = vmatprep.subr.mxu0 0.0
      %424 = vmatpush1.msra.mxu0 0.0
      %425 = vmatprep.subr.mxu0 0.0
      %426 = vmatpush1.msra.mxu0 0.0
      %427 = vmatprep.subr.mxu0 0.0
      %428 = vmatpush1.msra.mxu0 0.0
      %429 = vmatprep.subr.mxu0 0.0
      %430 = vmatpush1.msra.mxu0 0.0
      %431 = vmatprep.mubr.f32.mxu0 0.0
      %432 = vmatmul.mubr.f32.gmra.mrb[0].mxu0 %v358
      %v433 = vpop.f32.mrb[0].mxu0
      %v434 = vadd.f32 %v274, %v433
      %v435 = vpop.f32.mrb[0].mxu0
      %436 = vmatprep.mubr.f32.mxu0 0.0
      %437 = vmatmul.mubr.f32.gmra.mrb[0].mxu0 %v361
      %v438 = vpop.f32.mrb[0].mxu0
      %v439 = vadd.f32 %v275, %v438
      %v440 = vpop.f32.mrb[0].mxu0
      %441 = vdwg.mxu0
      %442 = vmatprep.subr.mxu0 0.0
      %443 = vmatpush1.msra.mxu0 %v267
      %444 = vmatprep.subr.mxu0 0.0
      %445 = vmatpush1.msra.mxu0 %v270
      %446 = vmatprep.subr.mxu0 0.0
      %447 = vmatpush1.msra.mxu0 0.0
      %448 = vmatprep.subr.mxu0 0.0
      %449 = vmatpush1.msra.mxu0 0.0
      %450 = vmatprep.subr.mxu0 0.0
      %451 = vmatpush1.msra.mxu0 0.0
      %452 = vmatprep.subr.mxu0 0.0
      %453 = vmatpush1.msra.mxu0 0.0
      %454 = vmatprep.subr.mxu0 0.0
      %455 = vmatpush1.msra.mxu0 0.0
      %456 = vmatprep.subr.mxu0 0.0
      %457 = vmatpush1.msra.mxu0 0.0
      %458 = vmatprep.subr.mxu0 0.0
      %459 = vmatpush1.msra.mxu0 0.0
      %460 = vmatprep.subr.mxu0 0.0
      %461 = vmatpush1.msra.mxu0 0.0
      %462 = vmatprep.subr.mxu0 0.0
      %463 = vmatpush1.msra.mxu0 0.0
      %464 = vmatprep.subr.mxu0 0.0
      %465 = vmatpush1.msra.mxu0 0.0
      %466 = vmatprep.subr.mxu0 0.0
      %467 = vmatpush1.msra.mxu0 0.0
      %468 = vmatprep.subr.mxu0 0.0
      %469 = vmatpush1.msra.mxu0 0.0
      %470 = vmatprep.subr.mxu0 0.0
      %471 = vmatpush1.msra.mxu0 0.0
      %472 = vmatprep.subr.mxu0 0.0
      %473 = vmatpush1.msra.mxu0 0.0
      %474 = vmatprep.subr.mxu0 0.0
      %475 = vmatpush1.msra.mxu0 0.0
      %476 = vmatprep.subr.mxu0 0.0
      %477 = vmatpush1.msra.mxu0 0.0
      %478 = vmatprep.subr.mxu0 0.0
      %479 = vmatpush1.msra.mxu0 0.0
      %480 = vmatprep.subr.mxu0 0.0
      %481 = vmatpush1.msra.mxu0 0.0
      %482 = vmatprep.subr.mxu0 0.0
      %483 = vmatpush1.msra.mxu0 0.0
      %484 = vmatprep.subr.mxu0 0.0
      %485 = vmatpush1.msra.mxu0 0.0
      %486 = vmatprep.subr.mxu0 0.0
      %487 = vmatpush1.msra.mxu0 0.0
      %488 = vmatprep.subr.mxu0 0.0
      %489 = vmatpush1.msra.mxu0 0.0
      %490 = vmatprep.subr.mxu0 0.0
      %491 = vmatpush1.msra.mxu0 0.0
      %492 = vmatprep.subr.mxu0 0.0
      %493 = vmatpush1.msra.mxu0 0.0
      %494 = vmatprep.subr.mxu0 0.0
      %495 = vmatpush1.msra.mxu0 0.0
      %496 = vmatprep.subr.mxu0 0.0
      %497 = vmatpush1.msra.mxu0 0.0
      %498 = vmatprep.subr.mxu0 0.0
      %499 = vmatpush1.msra.mxu0 0.0
      %500 = vmatprep.subr.mxu0 0.0
      %501 = vmatpush1.msra.mxu0 0.0
      %502 = vmatprep.subr.mxu0 0.0
      %503 = vmatpush1.msra.mxu0 0.0
      %504 = vmatprep.subr.mxu0 0.0
      %505 = vmatpush1.msra.mxu0 0.0
      %506 = vmatprep.mubr.f32.mxu0 0.0
      %507 = vmatmul.mubr.f32.gmra.mrb[0].mxu0 %v283
      %v508 = vpop.f32.mrb[0].mxu0
      %v509 = vadd.f32 %v279, %v508
      %v510 = vpop.f32.mrb[0].mxu0
      %511 = vdwg.mxu0
      %v512 = vmax.f32 %v509, 0.0
      %v514 = vsel %vm363, %v512, 0
      %516 = vmatprep.subr.mxu0 0.0
      %517 = vmatpush1.msra.mxu0 %v514
      %518 = vmatprep.subr.mxu0 0.0
      %519 = vmatpush1.msra.mxu0 0.0
      %520 = vmatprep.subr.mxu0 0.0
      %521 = vmatpush1.msra.mxu0 0.0
      %522 = vmatprep.subr.mxu0 0.0
      %523 = vmatpush1.msra.mxu0 0.0
      %524 = vmatprep.subr.mxu0 0.0
      %525 = vmatpush1.msra.mxu0 0.0
      %526 = vmatprep.subr.mxu0 0.0
      %527 = vmatpush1.msra.mxu0 0.0
      %528 = vmatprep.subr.mxu0 0.0
      %529 = vmatpush1.msra.mxu0 0.0
      %530 = vmatprep.subr.mxu0 0.0
      %531 = vmatpush1.msra.mxu0 0.0
      %532 = vmatprep.subr.mxu0 0.0
      %533 = vmatpush1.msra.mxu0 0.0
      %534 = vmatprep.subr.mxu0 0.0
      %535 = vmatpush1.msra.mxu0 0.0
      %536 = vmatprep.subr.mxu0 0.0
      %537 = vmatpush1.msra.mxu0 0.0
      %538 = vmatprep.subr.mxu0 0.0
      %539 = vmatpush1.msra.mxu0 0.0
      %540 = vmatprep.subr.mxu0 0.0
      %541 = vmatpush1.msra.mxu0 0.0
      %542 = vmatprep.subr.mxu0 0.0
      %543 = vmatpush1.msra.mxu0 0.0
      %544 = vmatprep.subr.mxu0 0.0
      %545 = vmatpush1.msra.mxu0 0.0
      %546 = vmatprep.subr.mxu0 0.0
      %547 = vmatpush1.msra.mxu0 0.0
      %548 = vmatprep.subr.mxu0 0.0
      %549 = vmatpush1.msra.mxu0 0.0
      %550 = vmatprep.subr.mxu0 0.0
      %551 = vmatpush1.msra.mxu0 0.0
      %552 = vmatprep.subr.mxu0 0.0
      %553 = vmatpush1.msra.mxu0 0.0
      %554 = vmatprep.subr.mxu0 0.0
      %555 = vmatpush1.msra.mxu0 0.0
      %556 = vmatprep.subr.mxu0 0.0
      %557 = vmatpush1.msra.mxu0 0.0
      %558 = vmatprep.subr.mxu0 0.0
      %559 = vmatpush1.msra.mxu0 0.0
      %560 = vmatprep.subr.mxu0 0.0
      %561 = vmatpush1.msra.mxu0 0.0
      %562 = vmatprep.subr.mxu0 0.0
      %563 = vmatpush1.msra.mxu0 0.0
      %564 = vmatprep.subr.mxu0 0.0
      %565 = vmatpush1.msra.mxu0 0.0
      %566 = vmatprep.subr.mxu0 0.0
      %567 = vmatpush1.msra.mxu0 0.0
      %568 = vmatprep.subr.mxu0 0.0
      %569 = vmatpush1.msra.mxu0 0.0
      %570 = vmatprep.subr.mxu0 0.0
      %571 = vmatpush1.msra.mxu0 0.0
      %572 = vmatprep.subr.mxu0 0.0
      %573 = vmatpush1.msra.mxu0 0.0
      %574 = vmatprep.subr.mxu0 0.0
      %575 = vmatpush1.msra.mxu0 0.0
      %576 = vmatprep.subr.mxu0 0.0
      %577 = vmatpush1.msra.mxu0 0.0
      %578 = vmatprep.subr.mxu0 0.0
      %579 = vmatpush1.msra.mxu0 0.0
      %580 = vmatprep.mubr.f32.mxu0 0.0
      %581 = vmatmul.mubr.f32.gmra.mrb[0].mxu0 %v358
      %v582 = vpop.f32.mrb[0].mxu0
      %v583 = vadd.f32 %v274, %v582
      %v584 = vpop.f32.mrb[0].mxu0
      %585 = vmatprep.mubr.f32.mxu0 0.0
      %586 = vmatmul.mubr.f32.gmra.mrb[0].mxu0 %v361
      %v587 = vpop.f32.mrb[0].mxu0
      %v588 = vadd.f32 %v275, %v587
      %v589 = vpop.f32.mrb[0].mxu0
      %590 = vdwg.mxu0
      %v591 = vadd.f32 %v434, %v583
      %v592 = vadd.f32 %v439, %v588
      %v593 = vxor.u32 %v591, 2147483648
      %v594 = vxor.u32 %v592, 2147483648
      %v595 = vmul.f32 %v593, 1.442695
      %v596 = vpow.pop %v595
      %v597 = vmul.f32 %v594, 1.442695
      %v598 = vpow.pop %v597
      %v599 = vadd.f32 %v596, 1.0
      %v600 = vadd.f32 %v598, 1.0
      %v601 = vrcp.pop %v599
      %v602 = vmul.f32 1.0, %v601
      %v603 = vrcp.pop %v600
      %v604 = vmul.f32 1.0, %v603
      %606 = vset.pattern.permute.xlu0 0
      %607 = vperm.xlu0 %606, %v602
      %v608 = vpop.permute.xlu0 %607
      %611 = vset.pattern.permute.xlu0 0
      %612 = vperm.xlu0 %611, %v604
      %v613 = vpop.permute.xlu0 %612
      %v615 = vmul.f32 %v253, %v608
      %v616 = vmul.f32 %v254, %v608
      %v617 = vmul.f32 %v255, %v613
      %v618 = vmul.f32 %v256, %v613
      %v619 = vadd.f32 %v615, %v617
      %v620 = vrot.slane %v619, 4
      %v621 = vadd.f32 %v619, %v620
      %v622 = vrot.slane %v621, 2
      %v623 = vadd.f32 %v621, %v622
      %v624 = vrot.slane %v623, 1
      %v625 = vadd.f32 %v623, %v624
      %v626 = vadd.f32 %v616, %v618
      %v627 = vrot.slane %v626, 4
      %v628 = vadd.f32 %v626, %v627
      %v629 = vrot.slane %v628, 2
      %v630 = vadd.f32 %v628, %v629
      %v631 = vrot.slane %v630, 1
      %v632 = vadd.f32 %v630, %v631
      %v633 = vmul.f32 %v625, 0.0625
      %v634 = vmul.f32 %v632, 0.0625
      %v635 = vmax.f32 %v615, %v617
      %v636 = vrot.slane %v635, 4
      %v637 = vmax.f32 %v635, %v636
      %v638 = vrot.slane %v637, 2
      %v639 = vmax.f32 %v637, %v638
      %v640 = vrot.slane %v639, 1
      %v641 = vmax.f32 %v639, %v640
      %v642 = vmax.f32 %v616, %v618
      %v643 = vrot.slane %v642, 4
      %v644 = vmax.f32 %v642, %v643
      %v645 = vrot.slane %v644, 2
      %v646 = vmax.f32 %v644, %v645
      %v647 = vrot.slane %v646, 1
      %v648 = vmax.f32 %v646, %v647
      %v649 = vld [vmem:[%s4] sm:$0xff]
      %v650 = vld [vmem:[%s4 + $0x8] sm:$0xff]
      %v651 = vld [vmem:[%s4 + $0x10] sm:$0xff]
      %v652 = vld [vmem:[%s4 + $0x18] sm:$0xff]
      %v653 = vld [vmem:[%s4 + $0x20] sm:$0xff]
      %v654 = vld [vmem:[%s4 + $0x28] sm:$0xff]
      %v655 = vld [vmem:[%s4 + $0x30] sm:$0xff]
      %v656 = vld [vmem:[%s4 + $0x38] sm:$0xff]
      %v657 = vld [vmem:[%s4 + $0x40] sm:$0xff]
      %v658 = vld [vmem:[%s4 + $0x48] sm:$0xff]
      %v659 = vld [vmem:[%s4 + $0x50] sm:$0xff]
      %v660 = vld [vmem:[%s4 + $0x58] sm:$0xff]
      %v661 = vld [vmem:[%s4 + $0x60] sm:$0xff]
      %v662 = vld [vmem:[%s4 + $0x68] sm:$0xff]
      %v663 = vld [vmem:[%s4 + $0x70] sm:$0xff]
      %v664 = vld [vmem:[%s4 + $0x78] sm:$0xff]
      %v665 = vld [vmem:[%s4 + $0x80] sm:$0xff]
      %v666 = vld [vmem:[%s4 + $0x88] sm:$0xff]
      %v667 = vld [vmem:[%s4 + $0x90] sm:$0xff]
      %v668 = vld [vmem:[%s4 + $0x98] sm:$0xff]
      %v669 = vld [vmem:[%s4 + $0xa0] sm:$0xff]
      %v670 = vld [vmem:[%s4 + $0xa8] sm:$0xff]
      %v671 = vld [vmem:[%s4 + $0xb0] sm:$0xff]
      %v672 = vld [vmem:[%s4 + $0xb8] sm:$0xff]
      %v673 = vld [vmem:[%s4 + $0xc0] sm:$0xff]
      %v674 = vld [vmem:[%s4 + $0xc8] sm:$0xff]
      %v675 = vld [vmem:[%s4 + $0xd0] sm:$0xff]
      %v676 = vld [vmem:[%s4 + $0xd8] sm:$0xff]
      %v677 = vld [vmem:[%s4 + $0xe0] sm:$0xff]
      %v678 = vld [vmem:[%s4 + $0xe8] sm:$0xff]
      %v679 = vld [vmem:[%s4 + $0xf0] sm:$0xff]
      %v680 = vld [vmem:[%s4 + $0xf8] sm:$0xff]
      %v681 = vld [vmem:[%s4 + $0x100] sm:$0xff]
      %v682 = vld [vmem:[%s4 + $0x108] sm:$0xff]
      %v683 = vld [vmem:[%s4 + $0x110] sm:$0xff]
      %v684 = vld [vmem:[%s4 + $0x118] sm:$0xff]
      %v685 = vld [vmem:[%s4 + $0x120] sm:$0xff]
      %v686 = vld [vmem:[%s4 + $0x128] sm:$0xff]
      %v687 = vld [vmem:[%s4 + $0x130] sm:$0xff]
      %v688 = vld [vmem:[%s4 + $0x138] sm:$0xff]
      %v689 = vld [vmem:[%s4 + $0x140] sm:$0xff]
      %v690 = vld [vmem:[%s4 + $0x148] sm:$0xff]
      %v691 = vld [vmem:[%s4 + $0x150] sm:$0xff]
      %v692 = vld [vmem:[%s4 + $0x158] sm:$0xff]
      %v693 = vld [vmem:[%s4 + $0x160] sm:$0xff]
      %v694 = vld [vmem:[%s4 + $0x168] sm:$0xff]
      %v695 = vld [vmem:[%s4 + $0x170] sm:$0xff]
      %v696 = vld [vmem:[%s4 + $0x178] sm:$0xff]
      %v697 = vld [vmem:[%s4 + $0x180] sm:$0xff]
      %v698 = vld [vmem:[%s4 + $0x188] sm:$0xff]
      %v699 = vld [vmem:[%s4 + $0x190] sm:$0xff]
      %v700 = vld [vmem:[%s4 + $0x198] sm:$0xff]
      %v701 = vld [vmem:[%s4 + $0x1a0] sm:$0xff]
      %v702 = vld [vmem:[%s4 + $0x1a8] sm:$0xff]
      %v703 = vld [vmem:[%s4 + $0x1b0] sm:$0xff]
      %v704 = vld [vmem:[%s4 + $0x1b8] sm:$0xff]
      %v705 = vld [vmem:[%s4 + $0x1c0] sm:$0xff]
      %v706 = vld [vmem:[%s4 + $0x1c8] sm:$0xff]
      %v707 = vld [vmem:[%s4 + $0x1d0] sm:$0xff]
      %v708 = vld [vmem:[%s4 + $0x1d8] sm:$0xff]
      %v709 = vld [vmem:[%s4 + $0x1e0] sm:$0xff]
      %v710 = vld [vmem:[%s4 + $0x1e8] sm:$0xff]
      %v711 = vld [vmem:[%s4 + $0x1f0] sm:$0xff]
      %v712 = vld [vmem:[%s4 + $0x1f8] sm:$0xff]
      %s713 = scalar_lea.vmem %s4, 512
      %v714 = vld [vmem:[%s713] sm:$0xff]
      %v715 = vld [vmem:[%s713 + $0x8] sm:$0xff]
      %v716 = vld [vmem:[%s713 + $0x10] sm:$0xff]
      %v717 = vld [vmem:[%s713 + $0x18] sm:$0xff]
      %v718 = vld [vmem:[%s713 + $0x20] sm:$0xff]
      %v719 = vld [vmem:[%s713 + $0x28] sm:$0xff]
      %v720 = vld [vmem:[%s713 + $0x30] sm:$0xff]
      %v721 = vld [vmem:[%s713 + $0x38] sm:$0xff]
      %v722 = vld [vmem:[%s713 + $0x40] sm:$0xff]
      %v723 = vld [vmem:[%s713 + $0x48] sm:$0xff]
      %v724 = vld [vmem:[%s713 + $0x50] sm:$0xff]
      %v725 = vld [vmem:[%s713 + $0x58] sm:$0xff]
      %v726 = vld [vmem:[%s713 + $0x60] sm:$0xff]
      %v727 = vld [vmem:[%s713 + $0x68] sm:$0xff]
      %v728 = vld [vmem:[%s713 + $0x70] sm:$0xff]
      %v729 = vld [vmem:[%s713 + $0x78] sm:$0xff]
      %v730 = vld [vmem:[%s713 + $0x80] sm:$0xff]
      %v731 = vld [vmem:[%s713 + $0x88] sm:$0xff]
      %v732 = vld [vmem:[%s713 + $0x90] sm:$0xff]
      %v733 = vld [vmem:[%s713 + $0x98] sm:$0xff]
      %v734 = vld [vmem:[%s713 + $0xa0] sm:$0xff]
      %v735 = vld [vmem:[%s713 + $0xa8] sm:$0xff]
      %v736 = vld [vmem:[%s713 + $0xb0] sm:$0xff]
      %v737 = vld [vmem:[%s713 + $0xb8] sm:$0xff]
      %v738 = vld [vmem:[%s713 + $0xc0] sm:$0xff]
      %v739 = vld [vmem:[%s713 + $0xc8] sm:$0xff]
      %v740 = vld [vmem:[%s713 + $0xd0] sm:$0xff]
      %v741 = vld [vmem:[%s713 + $0xd8] sm:$0xff]
      %v742 = vld [vmem:[%s713 + $0xe0] sm:$0xff]
      %v743 = vld [vmem:[%s713 + $0xe8] sm:$0xff]
      %v744 = vld [vmem:[%s713 + $0xf0] sm:$0xff]
      %v745 = vld [vmem:[%s713 + $0xf8] sm:$0xff]
      %v746 = vld [vmem:[%s713 + $0x100] sm:$0xff]
      %v747 = vld [vmem:[%s713 + $0x108] sm:$0xff]
      %v748 = vld [vmem:[%s713 + $0x110] sm:$0xff]
      %v749 = vld [vmem:[%s713 + $0x118] sm:$0xff]
      %v750 = vld [vmem:[%s713 + $0x120] sm:$0xff]
      %v751 = vld [vmem:[%s713 + $0x128] sm:$0xff]
      %v752 = vld [vmem:[%s713 + $0x130] sm:$0xff]
      %v753 = vld [vmem:[%s713 + $0x138] sm:$0xff]
      %v754 = vld [vmem:[%s713 + $0x140] sm:$0xff]
      %v755 = vld [vmem:[%s713 + $0x148] sm:$0xff]
      %v756 = vld [vmem:[%s713 + $0x150] sm:$0xff]
      %v757 = vld [vmem:[%s713 + $0x158] sm:$0xff]
      %v758 = vld [vmem:[%s713 + $0x160] sm:$0xff]
      %v759 = vld [vmem:[%s713 + $0x168] sm:$0xff]
      %v760 = vld [vmem:[%s713 + $0x170] sm:$0xff]
      %v761 = vld [vmem:[%s713 + $0x178] sm:$0xff]
      %v762 = vld [vmem:[%s713 + $0x180] sm:$0xff]
      %v763 = vld [vmem:[%s713 + $0x188] sm:$0xff]
      %v764 = vld [vmem:[%s713 + $0x190] sm:$0xff]
      %v765 = vld [vmem:[%s713 + $0x198] sm:$0xff]
      %v766 = vld [vmem:[%s713 + $0x1a0] sm:$0xff]
      %v767 = vld [vmem:[%s713 + $0x1a8] sm:$0xff]
      %v768 = vld [vmem:[%s713 + $0x1b0] sm:$0xff]
      %v769 = vld [vmem:[%s713 + $0x1b8] sm:$0xff]
      %v770 = vld [vmem:[%s713 + $0x1c0] sm:$0xff]
      %v771 = vld [vmem:[%s713 + $0x1c8] sm:$0xff]
      %v772 = vld [vmem:[%s713 + $0x1d0] sm:$0xff]
      %v773 = vld [vmem:[%s713 + $0x1d8] sm:$0xff]
      %v774 = vld [vmem:[%s713 + $0x1e0] sm:$0xff]
      %v775 = vld [vmem:[%s713 + $0x1e8] sm:$0xff]
      %v776 = vld [vmem:[%s713 + $0x1f0] sm:$0xff]
      %v777 = vld [vmem:[%s713 + $0x1f8] sm:$0xff]
      %778 = vmatprep.subr.mxu0 %v715
      %779 = vmatpush1.msra.mxu0 %v714
      %780 = vmatprep.subr.mxu0 %v717
      %781 = vmatpush1.msra.mxu0 %v716
      %782 = vmatprep.subr.mxu0 %v719
      %783 = vmatpush1.msra.mxu0 %v718
      %784 = vmatprep.subr.mxu0 %v721
      %785 = vmatpush1.msra.mxu0 %v720
      %786 = vmatprep.subr.mxu0 %v723
      %787 = vmatpush1.msra.mxu0 %v722
      %788 = vmatprep.subr.mxu0 %v725
      %789 = vmatpush1.msra.mxu0 %v724
      %790 = vmatprep.subr.mxu0 %v727
      %791 = vmatpush1.msra.mxu0 %v726
      %792 = vmatprep.subr.mxu0 %v729
      %793 = vmatpush1.msra.mxu0 %v728
      %794 = vmatprep.subr.mxu0 %v731
      %795 = vmatpush1.msra.mxu0 %v730
      %796 = vmatprep.subr.mxu0 %v733
      %797 = vmatpush1.msra.mxu0 %v732
      %798 = vmatprep.subr.mxu0 %v735
      %799 = vmatpush1.msra.mxu0 %v734
      %800 = vmatprep.subr.mxu0 %v737
      %801 = vmatpush1.msra.mxu0 %v736
      %802 = vmatprep.subr.mxu0 %v739
      %803 = vmatpush1.msra.mxu0 %v738
      %804 = vmatprep.subr.mxu0 %v741
      %805 = vmatpush1.msra.mxu0 %v740
      %806 = vmatprep.subr.mxu0 %v743
      %807 = vmatpush1.msra.mxu0 %v742
      %808 = vmatprep.subr.mxu0 %v745
      %809 = vmatpush1.msra.mxu0 %v744
      %810 = vmatprep.subr.mxu0 %v747
      %811 = vmatpush1.msra.mxu0 %v746
      %812 = vmatprep.subr.mxu0 %v749
      %813 = vmatpush1.msra.mxu0 %v748
      %814 = vmatprep.subr.mxu0 %v751
      %815 = vmatpush1.msra.mxu0 %v750
      %816 = vmatprep.subr.mxu0 %v753
      %817 = vmatpush1.msra.mxu0 %v752
      %818 = vmatprep.subr.mxu0 %v755
      %819 = vmatpush1.msra.mxu0 %v754
      %820 = vmatprep.subr.mxu0 %v757
      %821 = vmatpush1.msra.mxu0 %v756
      %822 = vmatprep.subr.mxu0 %v759
      %823 = vmatpush1.msra.mxu0 %v758
      %824 = vmatprep.subr.mxu0 %v761
      %825 = vmatpush1.msra.mxu0 %v760
      %826 = vmatprep.subr.mxu0 %v763
      %827 = vmatpush1.msra.mxu0 %v762
      %828 = vmatprep.subr.mxu0 %v765
      %829 = vmatpush1.msra.mxu0 %v764
      %830 = vmatprep.subr.mxu0 %v767
      %831 = vmatpush1.msra.mxu0 %v766
      %832 = vmatprep.subr.mxu0 %v769
      %833 = vmatpush1.msra.mxu0 %v768
      %834 = vmatprep.subr.mxu0 %v771
      %835 = vmatpush1.msra.mxu0 %v770
      %836 = vmatprep.subr.mxu0 %v773
      %837 = vmatpush1.msra.mxu0 %v772
      %838 = vmatprep.subr.mxu0 %v775
      %839 = vmatpush1.msra.mxu0 %v774
      %840 = vmatprep.subr.mxu0 %v777
      %841 = vmatpush1.msra.mxu0 %v776
      %842 = vmatprep.mubr.f32.mxu0 %v648
      %843 = vmatmul.mubr.f32.gmra.mrb[0].mxu0 %v641
      %v844 = vpop.f32.mrb[0].mxu0
      %v845 = vadd.f32 0.0, %v844
      %v846 = vpop.f32.mrb[0].mxu0
      %v847 = vadd.f32 0.0, %v846
      %848 = vdwg.mxu0
      %849 = vmatprep.subr.mxu0 %v650
      %850 = vmatpush1.msra.mxu0 %v649
      %851 = vmatprep.subr.mxu0 %v652
      %852 = vmatpush1.msra.mxu0 %v651
      %853 = vmatprep.subr.mxu0 %v654
      %854 = vmatpush1.msra.mxu0 %v653
      %855 = vmatprep.subr.mxu0 %v656
      %856 = vmatpush1.msra.mxu0 %v655
      %857 = vmatprep.subr.mxu0 %v658
      %858 = vmatpush1.msra.mxu0 %v657
      %859 = vmatprep.subr.mxu0 %v660
      %860 = vmatpush1.msra.mxu0 %v659
      %861 = vmatprep.subr.mxu0 %v662
      %862 = vmatpush1.msra.mxu0 %v661
      %863 = vmatprep.subr.mxu0 %v664
      %864 = vmatpush1.msra.mxu0 %v663
      %865 = vmatprep.subr.mxu0 %v666
      %866 = vmatpush1.msra.mxu0 %v665
      %867 = vmatprep.subr.mxu0 %v668
      %868 = vmatpush1.msra.mxu0 %v667
      %869 = vmatprep.subr.mxu0 %v670
      %870 = vmatpush1.msra.mxu0 %v669
      %871 = vmatprep.subr.mxu0 %v672
      %872 = vmatpush1.msra.mxu0 %v671
      %873 = vmatprep.subr.mxu0 %v674
      %874 = vmatpush1.msra.mxu0 %v673
      %875 = vmatprep.subr.mxu0 %v676
      %876 = vmatpush1.msra.mxu0 %v675
      %877 = vmatprep.subr.mxu0 %v678
      %878 = vmatpush1.msra.mxu0 %v677
      %879 = vmatprep.subr.mxu0 %v680
      %880 = vmatpush1.msra.mxu0 %v679
      %881 = vmatprep.subr.mxu0 %v682
      %882 = vmatpush1.msra.mxu0 %v681
      %883 = vmatprep.subr.mxu0 %v684
      %884 = vmatpush1.msra.mxu0 %v683
      %885 = vmatprep.subr.mxu0 %v686
      %886 = vmatpush1.msra.mxu0 %v685
      %887 = vmatprep.subr.mxu0 %v688
      %888 = vmatpush1.msra.mxu0 %v687
      %889 = vmatprep.subr.mxu0 %v690
      %890 = vmatpush1.msra.mxu0 %v689
      %891 = vmatprep.subr.mxu0 %v692
      %892 = vmatpush1.msra.mxu0 %v691
      %893 = vmatprep.subr.mxu0 %v694
      %894 = vmatpush1.msra.mxu0 %v693
      %895 = vmatprep.subr.mxu0 %v696
      %896 = vmatpush1.msra.mxu0 %v695
      %897 = vmatprep.subr.mxu0 %v698
      %898 = vmatpush1.msra.mxu0 %v697
      %899 = vmatprep.subr.mxu0 %v700
      %900 = vmatpush1.msra.mxu0 %v699
      %901 = vmatprep.subr.mxu0 %v702
      %902 = vmatpush1.msra.mxu0 %v701
      %903 = vmatprep.subr.mxu0 %v704
      %904 = vmatpush1.msra.mxu0 %v703
      %905 = vmatprep.subr.mxu0 %v706
      %906 = vmatpush1.msra.mxu0 %v705
      %907 = vmatprep.subr.mxu0 %v708
      %908 = vmatpush1.msra.mxu0 %v707
      %909 = vmatprep.subr.mxu0 %v710
      %910 = vmatpush1.msra.mxu0 %v709
      %911 = vmatprep.subr.mxu0 %v712
      %912 = vmatpush1.msra.mxu0 %v711
      %913 = vmatprep.mubr.f32.mxu0 %v634
      %914 = vmatmul.mubr.f32.gmra.mrb[0].mxu0 %v633
      %v915 = vpop.f32.mrb[0].mxu0
      %v916 = vadd.f32 %v845, %v915
      %v917 = vpop.f32.mrb[0].mxu0
      %v918 = vadd.f32 %v847, %v917
      %919 = vdwg.mxu0
      %s920 = sld [smem:[#allocation2]]
      %v921 = vstv %s920
      %v922 = vadd.f32 %v916, %v921
      %v923 = vadd.f32 %v918, %v921
      %v924 = vxor.u32 %v922, 2147483648
      %v925 = vxor.u32 %v923, 2147483648
      %v926 = vmul.f32 %v924, 1.442695
      %v927 = vpow.pop %v926
      %v928 = vmul.f32 %v925, 1.442695
      %v929 = vpow.pop %v928
      %v930 = vadd.f32 %v927, 1.0
      %v931 = vadd.f32 %v929, 1.0
      %v932 = vrcp.pop %v930
      %v933 = vmul.f32 1.0, %v932
      %v934 = vrcp.pop %v931
      %v935 = vmul.f32 1.0, %v934
      %v936 = vlaneseq
      %v937 = vshrl.u32 %v936, 7
      %v938 = vsub.s32 0, %v937
      %v939 = vrot.slane %v933, %v938
      %v940 = vlaneseq
      %v941 = vshrl.u32 %v940, 7
      %v942 = vsub.s32 0, %v941
      %v943 = vrot.slane %v935, %v942
      %v944 = vmul.f32 %v615, %v939
      %v945 = vmul.f32 %v616, %v943
      %v946 = vmul.f32 %v617, %v939
      %v947 = vmul.f32 %v618, %v943
      %948 = vst [vmem:[%s252] sm:$0xff] %v944
      %949 = vst [vmem:[%s252 + $0x8] sm:$0xff] %v945
      %950 = vst [vmem:[%s252 + $0x10] sm:$0xff] %v946
      %951 = vst [vmem:[%s252 + $0x18] sm:$0xff] %v947
      %p952 = scmp.lt.s32.totalorder %s18, 1
      %s953 = scalar_select %p952, %s18, 1
      %s954 = smul.addr %s953, 4
      %s955 = smul.addr %s954, 8
      %s956 = scalar_lea.vmem %s6, %s955
      // Predicated region
      $region45: #{cbam_forward.1} parent=43 // pred_check
        %p957 = pneg %p167
      $region46: #{cbam_forward.1} parent=43 // pred_check_branch
        %959 = sbr.rel (%p957) target = $region48
      $region47: #{cbam_forward.1} parent=43 // pred_region
        _
      $region48: #{cbam_forward.1} parent=43 // pred_fallthru
        _
    $region44: #{cbam_forward.1} parent=5 // pred_fallthru
      _
    %p960 = scmp.le.s32.totalorder 2, %s13
    // Predicated region
    $region49: #{cbam_forward.1} parent=5 // pred_check
      %p961 = pneg %p960
    $region50: #{cbam_forward.1} parent=5 // pred_check_branch
      %963 = sbr.rel (%p961) target = $region52
    $region51: #{cbam_forward.1} parent=5 // pred_region
      %s964 = ssub.s32 %s13, 2
      // Predicated region
      $region53: #{cbam_forward.1} parent=51 // pred_check
        %p965 = pneg %p173
      $region54: #{cbam_forward.1} parent=51 // pred_check_branch
        %967 = sbr.rel (%p965) target = $region56
      $region55: #{cbam_forward.1} parent=51 // pred_region
        %p968 = scmp.lt.s32.totalorder %s19, 1
        %s969 = scalar_select %p968, %s19, 1
        %s970 = smul.addr %s969, 4
        %s971 = smul.addr %s970, 8
        %s972 = scalar_lea.vmem %s6, %s971
      $region56: #{cbam_forward.1} parent=51 // pred_fallthru
        _
    $region52: #{cbam_forward.1} parent=5 // pred_fallthru
      _
  $region6: #{cbam_forward.1} parent=0 // loop_footer
    %s17 = sadd.s32 1, %s13
  $region7: #{cbam_forward.1} parent=0 // loop_footer_branch
    %12 = sbr.rel target = $region3
  $region8: #{cbam_forward.1} parent=0 // loop_exit
    _

</llo_original>
